<compile_context>
chip_gen: v7x
topology: tpu7x:2x2x1
jax: 0.10.0
libtpu: 0.0.40
codegen_flags: <defaults>
</compile_context>

<pallas_src>
import functools

import jax
import jax.numpy as jnp
from jax.experimental import pallas as pl
from jax.experimental.pallas import tpu as pltpu


# ------------------------------ in-kernel helpers --------------------------- #

def _layernorm(x, g, b, eps=1e-6):
    """Row-wise LayerNorm in fp32 (eps=1e-6 like the ViT config)."""
    x = x.astype(jnp.float32)
    mu = jnp.mean(x, axis=-1, keepdims=True)
    var = jnp.mean(jnp.square(x - mu), axis=-1, keepdims=True)
    return (x - mu) * jax.lax.rsqrt(var + eps) * g + b


# ------------------------------- Pallas kernels ----------------------------- #

def _linear_kernel(x_ref, w_ref, b_ref, o_ref):
    """(M, K) @ (K, N) + (1, N); bf16 operands, fp32 accumulate."""
    o_ref[...] = (jnp.dot(x_ref[...].astype(jnp.bfloat16), w_ref[...],
                          preferred_element_type=jnp.float32)
                  + b_ref[...])


def _head_kernel(x_ref, g_ref, b_ref, w_ref, hb_ref, o_ref):
    """Fused final LayerNorm (cls token only) + padded classification head."""
    h = _layernorm(x_ref[...], g_ref[...], b_ref[...])
    o_ref[...] = (jnp.dot(h.astype(jnp.bfloat16), w_ref[...],
                          preferred_element_type=jnp.float32)
                  + hb_ref[...])


def _block_kernel(num_heads,
                  x_ref, ln1g_ref, ln1b_ref, wqkv_ref, bqkv_ref,
                  wo_ref, bo_ref, ln2g_ref, ln2b_ref,
                  w1_ref, b1_ref, w2_ref, b2_ref,
                  xo_ref, probs_ref):
    """Whole pre-LN transformer block for one batch element (grid axis = B)."""
    N, D = x_ref.shape[1], x_ref.shape[2]
    Dh = D // num_heads

    x = x_ref[0]                                              # (N, D) fp32 residual stream

    # ---- LN1 -> fused QKV projection (one MXU push) ----
    h = _layernorm(x, ln1g_ref[...], ln1b_ref[...])
    qkv = (jnp.dot(h.astype(jnp.bfloat16), wqkv_ref[...],
                   preferred_element_type=jnp.float32)
           + bqkv_ref[...])                                   # (N, 3D) fp32

    # ---- multi-head attention; head split/merge stays in VMEM ----
    ctx_heads = []
    for hd in range(num_heads):
        lo = hd * Dh
        q = qkv[:, lo:lo + Dh].astype(jnp.bfloat16)           # 1/sqrt(Dh) folded into wq
        k = qkv[:, D + lo:D + lo + Dh].astype(jnp.bfloat16)
        v = qkv[:, 2 * D + lo:2 * D + lo + Dh].astype(jnp.bfloat16)

        s = jax.lax.dot_general(q, k, (((1,), (1,)), ((), ())),
                                preferred_element_type=jnp.float32)   # (N, N)
        s = s - jnp.max(s, axis=-1, keepdims=True)            # fp32 softmax
        e = jnp.exp(s)
        p = e * pl.reciprocal(jnp.sum(e, axis=-1, keepdims=True), approx=True)
        probs_ref[0, hd, :, :] = p                            # vis=True output
        ctx_heads.append(jnp.dot(p.astype(jnp.bfloat16), v,
                                 preferred_element_type=jnp.float32))  # (N, Dh)

    ctx = jnp.concatenate(ctx_heads, axis=-1)                 # (N, D) head merge
    attn_out = (jnp.dot(ctx.astype(jnp.bfloat16), wo_ref[...],
                        preferred_element_type=jnp.float32)
                + bo_ref[...])
    x = x + attn_out                                          # residual 1 (fp32)

    # ---- LN2 -> GELU MLP -> residual 2 ----
    h2 = _layernorm(x, ln2g_ref[...], ln2b_ref[...])
    m = (jnp.dot(h2.astype(jnp.bfloat16), w1_ref[...],
                 preferred_element_type=jnp.float32) + b1_ref[...])
    m = jax.nn.gelu(m, approximate=False)                     # exact erf GELU (torch default)
    m = (jnp.dot(m.astype(jnp.bfloat16), w2_ref[...],
                 preferred_element_type=jnp.float32) + b2_ref[...])
    xo_ref[0] = x + m


# --------------------------------- wrappers --------------------------------- #

def linear(x, w_bf16, b_row):
    M, _ = x.shape
    N = w_bf16.shape[1]
    return pl.pallas_call(
        _linear_kernel,
        out_shape=jax.ShapeDtypeStruct((M, N), jnp.float32),
    )(x, w_bf16, b_row)


def block_forward(x, lp, num_heads):
    """Fused transformer block.  x: (B, N, D).  Returns (new_x, probs)."""
    B, N, D = x.shape
    Hm = lp['w1'].shape[1]

    x_out, probs = pl.pallas_call(
        functools.partial(_block_kernel, num_heads),
        out_shape=(jax.ShapeDtypeStruct((B, N, D), jnp.float32),
                   jax.ShapeDtypeStruct((B, num_heads, N, N), jnp.float32)),
        grid=(B,),
        in_specs=[
            pl.BlockSpec((1, N, D), lambda b: (b, 0, 0)),      # x
            pl.BlockSpec((1, D), lambda b: (0, 0)),            # ln1_g
            pl.BlockSpec((1, D), lambda b: (0, 0)),            # ln1_b
            pl.BlockSpec((D, 3 * D), lambda b: (0, 0)),        # wqkv (bf16)
            pl.BlockSpec((1, 3 * D), lambda b: (0, 0)),        # bqkv
            pl.BlockSpec((D, D), lambda b: (0, 0)),            # wo (bf16)
            pl.BlockSpec((1, D), lambda b: (0, 0)),            # bo
            pl.BlockSpec((1, D), lambda b: (0, 0)),            # ln2_g
            pl.BlockSpec((1, D), lambda b: (0, 0)),            # ln2_b
            pl.BlockSpec((D, Hm), lambda b: (0, 0)),           # w1 (bf16)
            pl.BlockSpec((1, Hm), lambda b: (0, 0)),           # b1
            pl.BlockSpec((Hm, D), lambda b: (0, 0)),           # w2 (bf16)
            pl.BlockSpec((1, D), lambda b: (0, 0)),            # b2
        ],
        out_specs=(pl.BlockSpec((1, N, D), lambda b: (b, 0, 0)),
                   pl.BlockSpec((1, num_heads, N, N), lambda b: (b, 0, 0, 0))),
        compiler_params=pltpu.CompilerParams(dimension_semantics=("parallel",)),
    )(x, lp['ln1_g'], lp['ln1_b'], lp['wqkv'], lp['bqkv'], lp['wo'], lp['bo'],
      lp['ln2_g'], lp['ln2_b'], lp['w1'], lp['b1'], lp['w2'], lp['b2'])
    return x_out, probs


def maws_select(x, attn, num_token):
    """Mutual-Attention-Weight-Selection of discriminative patch tokens."""
    # TODO(synk): top-k + gather kept in plain JAX (no clean Pallas equivalent).
    a = attn.mean(axis=1)                              # (B, N, N) head average
    cls_to_tok = a[:, 0, 1:]                           # cls attends patches
    tok_to_cls = jax.nn.softmax(a[:, 1:, 0], axis=-1)  # patches attend cls
    mutual = cls_to_tok * tok_to_cls                   # (B, N-1)
    _, idx = jax.lax.top_k(mutual, num_token)          # (B, num_token)
    sel = jnp.take_along_axis(x[:, 1:, :], idx[:, :, None], axis=1)
    return sel


def ffvt_forward(images, pp, cfg):
    """FFVT.forward(images) -> (logits, attention_weights)   (vis=True)."""
    B, C, Himg, Wimg = images.shape
    P = cfg['patch_size']
    D = cfg['hidden']
    nH, nW = Himg // P, Wimg // P
    n_patch = nH * nW

    # Patch embedding == Conv2d(C, D, kernel=P, stride=P): extract patches in
    # (c, kh, kw) order to match the flattened conv weight, then matmul kernel.
    patches = (images.reshape(B, C, nH, P, nW, P)
                     .transpose(0, 2, 4, 1, 3, 5)
                     .reshape(B * n_patch, C * P * P))
    x = linear(patches, pp['patch_w'], pp['patch_b']).reshape(B, n_patch, D)

    cls = jnp.broadcast_to(pp['cls_token'], (B, 1, D))
    x = jnp.concatenate([cls, x], axis=1) + pp['pos_embed']
    # dropout / stochastic-depth are identity at inference (train=False)

    sel_tokens, attn_all = [], []
    for lp in pp['layers'][:-1]:
        x, attn = block_forward(x, lp, cfg['num_heads'])
        attn_all.append(attn)
        sel_tokens.append(maws_select(x, attn, cfg['num_token']))

    # Feature fusion: last block consumes [cls ; selected tokens of all layers]
    fused = jnp.concatenate([x[:, :1, :]] + sel_tokens, axis=1)
    x, attn = block_forward(fused, pp['layers'][-1], cfg['num_heads'])
    attn_all.append(attn)

    # Final encoder LayerNorm + classification head, fused, on cls token only
    # (per-token LN => logits identical to norming all tokens then taking cls).
    cls_tok = x[:, 0, :]
    logits_pad = pl.pallas_call(
        _head_kernel,
        out_shape=jax.ShapeDtypeStruct((B, pp['head_w'].shape[1]), jnp.float32),
    )(cls_tok, pp['norm_g'], pp['norm_b'], pp['head_w'], pp['head_b'])
    logits = logits_pad[:, :pp['num_classes']]
    return logits, attn_all


# ------------------------------- parameters --------------------------------- #

def init_params(key, cfg):
    """PyTorch-layout fp32 parameters (Conv2d patch embed flattened)."""
    D = cfg['hidden']
    P = cfg['patch_size']
    C = cfg['in_chans']
    mlp_dim = cfg['mlp_dim']
    L = cfg['num_layers']
    ncls = cfg['num_classes']
    n_patch = cfg['n_patch']

    keys = iter(jax.random.split(key, 128))

    def nrm(shape, std=0.02):
        return (std * jax.random.normal(next(keys), shape)).astype(jnp.float32)

    params = {
        'patch_w': nrm((C * P * P, D)),                # Conv2d weight, flattened
        'patch_b': jnp.zeros((D,), jnp.float32),
        'cls_token': nrm((1, 1, D)),
        'pos_embed': nrm((1, n_patch + 1, D)),
        'norm_g': jnp.ones((D,), jnp.float32),
        'norm_b': jnp.zeros((D,), jnp.float32),
        'head_w': jnp.zeros((D, ncls), jnp.float32),   # zero_head=True
        'head_b': jnp.zeros((ncls,), jnp.float32),
        'layers': [],
    }
    for _ in range(L):
        params['layers'].append({
            'ln1_g': jnp.ones((D,), jnp.float32), 'ln1_b': jnp.zeros((D,), jnp.float32),
            'wq': nrm((D, D)), 'bq': jnp.zeros((D,), jnp.float32),
            'wk': nrm((D, D)), 'bk': jnp.zeros((D,), jnp.float32),
            'wv': nrm((D, D)), 'bv': jnp.zeros((D,), jnp.float32),
            'wo': nrm((D, D)), 'bo': jnp.zeros((D,), jnp.float32),
            'ln2_g': jnp.ones((D,), jnp.float32), 'ln2_b': jnp.zeros((D,), jnp.float32),
            'w1': nrm((D, mlp_dim)), 'b1': jnp.zeros((mlp_dim,), jnp.float32),
            'w2': nrm((mlp_dim, D)), 'b2': jnp.zeros((D,), jnp.float32),
        })
    return params


def prepare_params(params, cfg):
    """Device-friendly params: fused QKV, scale folded into q, bf16 weights,
    2D biases, 128-lane-padded classification head."""
    D = cfg['hidden']
    Dh = D // cfg['num_heads']
    scale = 1.0 / float(Dh) ** 0.5

    ncls = params['head_w'].shape[1]
    npad = pl.cdiv(ncls, 128) * 128
    pp = {
        'patch_w': params['patch_w'].astype(jnp.bfloat16),
        'patch_b': params['patch_b'].reshape(1, D),
        'cls_token': params['cls_token'],
        'pos_embed': params['pos_embed'],
        'norm_g': params['norm_g'].reshape(1, D),
        'norm_b': params['norm_b'].reshape(1, D),
        'head_w': jnp.pad(params['head_w'],
                          ((0, 0), (0, npad - ncls))).astype(jnp.bfloat16),
        'head_b': jnp.pad(params['head_b'], (0, npad - ncls)).reshape(1, npad),
        'num_classes': ncls,
        'layers': [],
    }
    for p in params['layers']:
        wqkv = jnp.concatenate([p['wq'] * scale, p['wk'], p['wv']],
                               axis=1).astype(jnp.bfloat16)
        bqkv = jnp.concatenate([p['bq'] * scale, p['bk'], p['bv']]).reshape(1, 3 * D)
        pp['layers'].append({
            'ln1_g': p['ln1_g'].reshape(1, D), 'ln1_b': p['ln1_b'].reshape(1, D),
            'wqkv': wqkv, 'bqkv': bqkv,
            'wo': p['wo'].astype(jnp.bfloat16), 'bo': p['bo'].reshape(1, D),
            'ln2_g': p['ln2_g'].reshape(1, D), 'ln2_b': p['ln2_b'].reshape(1, D),
            'w1': p['w1'].astype(jnp.bfloat16), 'b1': p['b1'].reshape(1, -1),
            'w2': p['w2'].astype(jnp.bfloat16), 'b2': p['b2'].reshape(1, D),
        })
    return pp


# ----------------------------------- main ------------------------------------ #

if __name__ == "__main__":
    # Small FFVT: image 32x32 -> 2x2=4 patches (+cls), 3 blocks (last = fusion),
    # hidden 32, 4 heads, mlp 64, num_token=2 selected per non-final layer.
    cfg = dict(patch_size=16, in_chans=3, hidden=32, num_heads=4, mlp_dim=64,
               num_layers=3, num_token=2, num_classes=5, n_patch=4)

    key = jax.random.PRNGKey(0)
    kp, kx = jax.random.split(key)
    params = init_params(kp, cfg)
    prepped = prepare_params(params, cfg)
    images = jax.random.normal(kx, (2, 3, 32, 32), dtype=jnp.float32)

    logits, attns = ffvt_forward(images, prepped, cfg)
    jax.block_until_ready(logits)
    assert logits.shape == (2, cfg['num_classes'])
    assert all(a.shape[1] == cfg['num_heads'] for a in attns)
    print("KERNEL_OK")
</pallas_src>

<mosaic_0001>
module attributes {stable_mosaic.version = 11 : i64} {
  func.func @_linear_kernel(%arg0: memref<8x768xf32, #tpu.memory_space<vmem>>, %arg1: memref<768x32xbf16, #tpu.memory_space<vmem>>, %arg2: memref<1x32xf32, #tpu.memory_space<vmem>>, %arg3: memref<8x32xf32, #tpu.memory_space<vmem>>) attributes {dimension_semantics = [], scalar_prefetch = 0 : i64, scratch_operands = 0 : i64, tpu.core_type = #tpu.core_type<tc>} {
    %c0 = arith.constant 0 : index
    %c0_0 = arith.constant 0 : index
    %0 = vector.load %arg0[%c0, %c0_0] : memref<8x768xf32, #tpu.memory_space<vmem>>, vector<8x768xf32>
    %1 = arith.truncf %0 : vector<8x768xf32> to vector<8x768xbf16>
    %c0_1 = arith.constant 0 : index
    %c0_2 = arith.constant 0 : index
    %2 = vector.load %arg1[%c0_1, %c0_2] : memref<768x32xbf16, #tpu.memory_space<vmem>>, vector<768x32xbf16>
    %cst = arith.constant dense<0.000000e+00> : vector<8x32xf32>
    %3 = tpu.matmul %1, %2, %cst {dimension_numbers = #tpu.dot_dimension_numbers<[1], [0], [0], [1], [0, 0, 1, 1], [], []>} : vector<8x768xbf16>, vector<768x32xbf16>, vector<8x32xf32> -> vector<8x32xf32>
    %c0_3 = arith.constant 0 : index
    %c0_4 = arith.constant 0 : index
    %4 = vector.load %arg2[%c0_3, %c0_4] : memref<1x32xf32, #tpu.memory_space<vmem>>, vector<1x32xf32>
    %5 = vector.broadcast %4 : vector<1x32xf32> to vector<8x32xf32>
    %6 = arith.addf %3, %5 : vector<8x32xf32>
    %c0_5 = arith.constant 0 : index
    %c0_6 = arith.constant 0 : index
    %7 = vector.load %arg3[%c0_5, %c0_6] : memref<8x32xf32, #tpu.memory_space<vmem>>, vector<8x32xf32>
    tpu.vector_store %arg3[%c0_5, %c0_6], %6 {strides = array<i32>} : memref<8x32xf32, #tpu.memory_space<vmem>>, vector<8x32xf32>,
    return
  }
}

</mosaic_0001>

<llo_original>
// kernel: tpu_custom_call.1
$region0: #{tpu_custom_call.1}
  #allocation0 [shape = 'u32[]', space=smem, size = 0x4, offset = 0x4, fixed_abs, tag = 'smem constant byte address 0x4 - core index']
  #allocation1 [shape = 'u32[144,128]{1,0:T(1,128)}', space=vmem, size = 0x12000, scoped, tag = 'internal scratch']
  %s0 = inlined_call_operand.vmem [shape: f32[8,768], index: 0, kind: input, shape index: {}]
  %s1 = inlined_call_operand.vmem [shape: bf16[768,32], index: 1, kind: input, shape index: {}]
  %s2 = inlined_call_operand.vmem [shape: f32[1,32], index: 2, kind: input, shape index: {}]
  %s3 = inlined_call_operand.hbm [shape: f32[8,32], index: 3, kind: output, shape index: {}]
  %s4 = sld [smem:[#allocation0]]
  $region22: #{tpu_custom_call.1} parent=0
    _
  %s6 = ssub.s32 1, %s4
  %s7 = scalar_select 0, %s6, %s4
  $region1: #{tpu_custom_call.1} parent=0
    #allocation2 [shape = 'u8[4096]{0}', space=vmem, size = 0x1000, scoped, tag = 'output window, operand 0, single buffered']
    #allocation3 [shape = 's32[1]{0}', space=sflag, size = 0x4, scoped, tag = 'scoped memory for tpu_custom_call.1']
    %8 = vsyncpa [#allocation3], 0
    // Predicated region
    $region2: #{tpu_custom_call.1} parent=1 // pred_check
      _
    $region3: #{tpu_custom_call.1} parent=1 // pred_check_branch
      %10 = sbr.rel (0) target = $region5
    $region4: #{tpu_custom_call.1} parent=1 // pred_region
      _
    $region5: #{tpu_custom_call.1} parent=1 // pred_fallthru
      _
    // Predicated region
    $region6: #{tpu_custom_call.1} parent=1 // pred_check
      _
    $region7: #{tpu_custom_call.1} parent=1 // pred_check_branch
      %12 = sbr.rel (0) target = $region9
    $region8: #{tpu_custom_call.1} parent=1 // pred_region
      _
    $region9: #{tpu_custom_call.1} parent=1 // pred_fallthru
      _
    // Predicated region
    $region10: #{tpu_custom_call.1} parent=1 // pred_check
      _
    $region11: #{tpu_custom_call.1} parent=1 // pred_check_branch
      %14 = sbr.rel (0) target = $region13
    $region12: #{tpu_custom_call.1} parent=1 // pred_region
      _
    $region13: #{tpu_custom_call.1} parent=1 // pred_fallthru
      _
    %v16 = vld [vmem:[%s0] sm:$0xff]
    %v17 = vld [vmem:[%s0 + $0x8] sm:$0xff]
    %v18 = vld [vmem:[%s0 + $0x10] sm:$0xff]
    %v19 = vld [vmem:[%s0 + $0x18] sm:$0xff]
    %v20 = vld [vmem:[%s0 + $0x20] sm:$0xff]
    %v21 = vld [vmem:[%s0 + $0x28] sm:$0xff]
    %v22 = vpack.c.bf16 %v16, %v16
    %v23 = vpack.c.bf16 %v17, %v17
    %v24 = vpack.c.bf16 %v18, %v18
    %v25 = vpack.c.bf16 %v19, %v19
    %v26 = vpack.c.bf16 %v20, %v20
    %v27 = vpack.c.bf16 %v21, %v21
    %v28 = vld [vmem:[%s1] sm:$0xf]
    %v29 = vld [vmem:[%s1 + $0x4] sm:$0xf]
    %v30 = vld [vmem:[%s1 + $0x8] sm:$0xf]
    %v31 = vld [vmem:[%s1 + $0xc] sm:$0xf]
    %v32 = vld [vmem:[%s1 + $0x10] sm:$0xf]
    %v33 = vld [vmem:[%s1 + $0x14] sm:$0xf]
    %v34 = vld [vmem:[%s1 + $0x18] sm:$0xf]
    %v35 = vld [vmem:[%s1 + $0x1c] sm:$0xf]
    %v36 = vld [vmem:[%s1 + $0x20] sm:$0xf]
    %v37 = vld [vmem:[%s1 + $0x24] sm:$0xf]
    %v38 = vld [vmem:[%s1 + $0x28] sm:$0xf]
    %v39 = vld [vmem:[%s1 + $0x2c] sm:$0xf]
    %v40 = vld [vmem:[%s1 + $0x30] sm:$0xf]
    %v41 = vld [vmem:[%s1 + $0x34] sm:$0xf]
    %v42 = vld [vmem:[%s1 + $0x38] sm:$0xf]
    %v43 = vld [vmem:[%s1 + $0x3c] sm:$0xf]
    %v44 = vld [vmem:[%s1 + $0x40] sm:$0xf]
    %v45 = vld [vmem:[%s1 + $0x44] sm:$0xf]
    %v46 = vld [vmem:[%s1 + $0x48] sm:$0xf]
    %v47 = vld [vmem:[%s1 + $0x4c] sm:$0xf]
    %v48 = vld [vmem:[%s1 + $0x50] sm:$0xf]
    %v49 = vld [vmem:[%s1 + $0x54] sm:$0xf]
    %v50 = vld [vmem:[%s1 + $0x58] sm:$0xf]
    %v51 = vld [vmem:[%s1 + $0x5c] sm:$0xf]
    %v52 = vld [vmem:[%s1 + $0x60] sm:$0xf]
    %v53 = vld [vmem:[%s1 + $0x64] sm:$0xf]
    %v54 = vld [vmem:[%s1 + $0x68] sm:$0xf]
    %v55 = vld [vmem:[%s1 + $0x6c] sm:$0xf]
    %v56 = vld [vmem:[%s1 + $0x70] sm:$0xf]
    %v57 = vld [vmem:[%s1 + $0x74] sm:$0xf]
    %v58 = vld [vmem:[%s1 + $0x78] sm:$0xf]
    %v59 = vld [vmem:[%s1 + $0x7c] sm:$0xf]
    %v60 = vld [vmem:[%s1 + $0x80] sm:$0xf]
    %v61 = vld [vmem:[%s1 + $0x84] sm:$0xf]
    %v62 = vld [vmem:[%s1 + $0x88] sm:$0xf]
    %v63 = vld [vmem:[%s1 + $0x8c] sm:$0xf]
    %v64 = vld [vmem:[%s1 + $0x90] sm:$0xf]
    %v65 = vld [vmem:[%s1 + $0x94] sm:$0xf]
    %v66 = vld [vmem:[%s1 + $0x98] sm:$0xf]
    %v67 = vld [vmem:[%s1 + $0x9c] sm:$0xf]
    %v68 = vld [vmem:[%s1 + $0xa0] sm:$0xf]
    %v69 = vld [vmem:[%s1 + $0xa4] sm:$0xf]
    %v70 = vld [vmem:[%s1 + $0xa8] sm:$0xf]
    %v71 = vld [vmem:[%s1 + $0xac] sm:$0xf]
    %v72 = vld [vmem:[%s1 + $0xb0] sm:$0xf]
    %v73 = vld [vmem:[%s1 + $0xb4] sm:$0xf]
    %v74 = vld [vmem:[%s1 + $0xb8] sm:$0xf]
    %v75 = vld [vmem:[%s1 + $0xbc] sm:$0xf]
    %v76 = vld [vmem:[%s1 + $0xc0] sm:$0xf]
    %v77 = vld [vmem:[%s1 + $0xc4] sm:$0xf]
    %v78 = vld [vmem:[%s1 + $0xc8] sm:$0xf]
    %v79 = vld [vmem:[%s1 + $0xcc] sm:$0xf]
    %v80 = vld [vmem:[%s1 + $0xd0] sm:$0xf]
    %v81 = vld [vmem:[%s1 + $0xd4] sm:$0xf]
    %v82 = vld [vmem:[%s1 + $0xd8] sm:$0xf]
    %v83 = vld [vmem:[%s1 + $0xdc] sm:$0xf]
    %v84 = vld [vmem:[%s1 + $0xe0] sm:$0xf]
    %v85 = vld [vmem:[%s1 + $0xe4] sm:$0xf]
    %v86 = vld [vmem:[%s1 + $0xe8] sm:$0xf]
    %v87 = vld [vmem:[%s1 + $0xec] sm:$0xf]
    %v88 = vld [vmem:[%s1 + $0xf0] sm:$0xf]
    %v89 = vld [vmem:[%s1 + $0xf4] sm:$0xf]
    %v90 = vld [vmem:[%s1 + $0xf8] sm:$0xf]
    %v91 = vld [vmem:[%s1 + $0xfc] sm:$0xf]
    %v92 = vld [vmem:[%s1 + $0x100] sm:$0xf]
    %v93 = vld [vmem:[%s1 + $0x104] sm:$0xf]
    %v94 = vld [vmem:[%s1 + $0x108] sm:$0xf]
    %v95 = vld [vmem:[%s1 + $0x10c] sm:$0xf]
    %v96 = vld [vmem:[%s1 + $0x110] sm:$0xf]
    %v97 = vld [vmem:[%s1 + $0x114] sm:$0xf]
    %v98 = vld [vmem:[%s1 + $0x118] sm:$0xf]
    %v99 = vld [vmem:[%s1 + $0x11c] sm:$0xf]
    %v100 = vld [vmem:[%s1 + $0x120] sm:$0xf]
    %v101 = vld [vmem:[%s1 + $0x124] sm:$0xf]
    %v102 = vld [vmem:[%s1 + $0x128] sm:$0xf]
    %v103 = vld [vmem:[%s1 + $0x12c] sm:$0xf]
    %v104 = vld [vmem:[%s1 + $0x130] sm:$0xf]
    %v105 = vld [vmem:[%s1 + $0x134] sm:$0xf]
    %v106 = vld [vmem:[%s1 + $0x138] sm:$0xf]
    %v107 = vld [vmem:[%s1 + $0x13c] sm:$0xf]
    %v108 = vld [vmem:[%s1 + $0x140] sm:$0xf]
    %v109 = vld [vmem:[%s1 + $0x144] sm:$0xf]
    %v110 = vld [vmem:[%s1 + $0x148] sm:$0xf]
    %v111 = vld [vmem:[%s1 + $0x14c] sm:$0xf]
    %v112 = vld [vmem:[%s1 + $0x150] sm:$0xf]
    %v113 = vld [vmem:[%s1 + $0x154] sm:$0xf]
    %v114 = vld [vmem:[%s1 + $0x158] sm:$0xf]
    %v115 = vld [vmem:[%s1 + $0x15c] sm:$0xf]
    %v116 = vld [vmem:[%s1 + $0x160] sm:$0xf]
    %v117 = vld [vmem:[%s1 + $0x164] sm:$0xf]
    %v118 = vld [vmem:[%s1 + $0x168] sm:$0xf]
    %v119 = vld [vmem:[%s1 + $0x16c] sm:$0xf]
    %v120 = vld [vmem:[%s1 + $0x170] sm:$0xf]
    %v121 = vld [vmem:[%s1 + $0x174] sm:$0xf]
    %v122 = vld [vmem:[%s1 + $0x178] sm:$0xf]
    %v123 = vld [vmem:[%s1 + $0x17c] sm:$0xf]
    %v124 = vld [vmem:[%s2] sm:$0x1]
    %v126 = vlaneseq
    %v127 = vshrl.u32 %v126, 7
    %v128 = vsub.s32 0, %v127
    %v129 = vrot.slane %v124, %v128
    %v227 = vunpack.c.l.b16 %v28
    %v228 = vunpack.c.l.b16 %v29
    %v229 = vunpack.c.l.b16 %v30
    %v230 = vunpack.c.l.b16 %v31
    %v231 = vunpack.c.l.b16 %v32
    %v232 = vunpack.c.l.b16 %v33
    %v233 = vunpack.c.l.b16 %v34
    %v234 = vunpack.c.l.b16 %v35
    %v235 = vunpack.c.l.b16 %v36
    %v236 = vunpack.c.l.b16 %v37
    %v237 = vunpack.c.l.b16 %v38
    %v238 = vunpack.c.l.b16 %v39
    %v239 = vunpack.c.l.b16 %v40
    %v240 = vunpack.c.l.b16 %v41
    %v241 = vunpack.c.l.b16 %v42
    %v242 = vunpack.c.l.b16 %v43
    %v243 = vunpack.c.l.b16 %v44
    %v244 = vunpack.c.l.b16 %v45
    %v245 = vunpack.c.l.b16 %v46
    %v246 = vunpack.c.l.b16 %v47
    %v247 = vunpack.c.l.b16 %v48
    %v248 = vunpack.c.l.b16 %v49
    %v249 = vunpack.c.l.b16 %v50
    %v250 = vunpack.c.l.b16 %v51
    %v251 = vunpack.c.l.b16 %v52
    %v252 = vunpack.c.l.b16 %v53
    %v253 = vunpack.c.l.b16 %v54
    %v254 = vunpack.c.l.b16 %v55
    %v255 = vunpack.c.l.b16 %v56
    %v256 = vunpack.c.l.b16 %v57
    %v257 = vunpack.c.l.b16 %v58
    %v258 = vunpack.c.l.b16 %v59
    %v259 = vunpack.c.l.b16 %v60
    %v260 = vunpack.c.l.b16 %v61
    %v261 = vunpack.c.l.b16 %v62
    %v262 = vunpack.c.l.b16 %v63
    %v263 = vunpack.c.l.b16 %v64
    %v264 = vunpack.c.l.b16 %v65
    %v265 = vunpack.c.l.b16 %v66
    %v266 = vunpack.c.l.b16 %v67
    %v267 = vunpack.c.l.b16 %v68
    %v268 = vunpack.c.l.b16 %v69
    %v269 = vunpack.c.l.b16 %v70
    %v270 = vunpack.c.l.b16 %v71
    %v271 = vunpack.c.l.b16 %v72
    %v272 = vunpack.c.l.b16 %v73
    %v273 = vunpack.c.l.b16 %v74
    %v274 = vunpack.c.l.b16 %v75
    %v275 = vunpack.c.l.b16 %v76
    %v276 = vunpack.c.l.b16 %v77
    %v277 = vunpack.c.l.b16 %v78
    %v278 = vunpack.c.l.b16 %v79
    %v279 = vunpack.c.l.b16 %v80
    %v280 = vunpack.c.l.b16 %v81
    %v281 = vunpack.c.l.b16 %v82
    %v282 = vunpack.c.l.b16 %v83
    %v283 = vunpack.c.l.b16 %v84
    %v284 = vunpack.c.l.b16 %v85
    %v285 = vunpack.c.l.b16 %v86
    %v286 = vunpack.c.l.b16 %v87
    %v287 = vunpack.c.l.b16 %v88
    %v288 = vunpack.c.l.b16 %v89
    %v289 = vunpack.c.l.b16 %v90
    %v290 = vunpack.c.l.b16 %v91
    %v291 = vunpack.c.l.b16 %v92
    %v292 = vunpack.c.l.b16 %v93
    %v293 = vunpack.c.l.b16 %v94
    %v294 = vunpack.c.l.b16 %v95
    %v295 = vunpack.c.l.b16 %v96
    %v296 = vunpack.c.l.b16 %v97
    %v297 = vunpack.c.l.b16 %v98
    %v298 = vunpack.c.l.b16 %v99
    %v299 = vunpack.c.l.b16 %v100
    %v300 = vunpack.c.l.b16 %v101
    %v301 = vunpack.c.l.b16 %v102
    %v302 = vunpack.c.l.b16 %v103
    %v303 = vunpack.c.l.b16 %v104
    %v304 = vunpack.c.l.b16 %v105
    %v305 = vunpack.c.l.b16 %v106
    %v306 = vunpack.c.l.b16 %v107
    %v307 = vunpack.c.l.b16 %v108
    %v308 = vunpack.c.l.b16 %v109
    %v309 = vunpack.c.l.b16 %v110
    %v310 = vunpack.c.l.b16 %v111
    %v311 = vunpack.c.l.b16 %v112
    %v312 = vunpack.c.l.b16 %v113
    %v313 = vunpack.c.l.b16 %v114
    %v314 = vunpack.c.l.b16 %v115
    %v315 = vunpack.c.l.b16 %v116
    %v316 = vunpack.c.l.b16 %v117
    %v317 = vunpack.c.l.b16 %v118
    %v318 = vunpack.c.l.b16 %v119
    %v319 = vunpack.c.l.b16 %v120
    %v320 = vunpack.c.l.b16 %v121
    %v321 = vunpack.c.l.b16 %v122
    %v322 = vunpack.c.l.b16 %v123
    %v323 = vpack.c.b16 %v228, %v227
    %v324 = vpack.c.b16 %v230, %v229
    %v325 = vpack.c.b16 %v232, %v231
    %v326 = vpack.c.b16 %v234, %v233
    %v327 = vpack.c.b16 %v236, %v235
    %v328 = vpack.c.b16 %v238, %v237
    %v329 = vpack.c.b16 %v240, %v239
    %v330 = vpack.c.b16 %v242, %v241
    %v331 = vpack.c.b16 %v244, %v243
    %v332 = vpack.c.b16 %v246, %v245
    %v333 = vpack.c.b16 %v248, %v247
    %v334 = vpack.c.b16 %v250, %v249
    %v335 = vpack.c.b16 %v252, %v251
    %v336 = vpack.c.b16 %v254, %v253
    %v337 = vpack.c.b16 %v256, %v255
    %v338 = vpack.c.b16 %v258, %v257
    %v339 = vpack.c.b16 %v260, %v259
    %v340 = vpack.c.b16 %v262, %v261
    %v341 = vpack.c.b16 %v264, %v263
    %v342 = vpack.c.b16 %v266, %v265
    %v343 = vpack.c.b16 %v268, %v267
    %v344 = vpack.c.b16 %v270, %v269
    %v345 = vpack.c.b16 %v272, %v271
    %v346 = vpack.c.b16 %v274, %v273
    %v347 = vpack.c.b16 %v276, %v275
    %v348 = vpack.c.b16 %v278, %v277
    %v349 = vpack.c.b16 %v280, %v279
    %v350 = vpack.c.b16 %v282, %v281
    %v351 = vpack.c.b16 %v284, %v283
    %v352 = vpack.c.b16 %v286, %v285
    %v353 = vpack.c.b16 %v288, %v287
    %v354 = vpack.c.b16 %v290, %v289
    %v355 = vpack.c.b16 %v292, %v291
    %v356 = vpack.c.b16 %v294, %v293
    %v357 = vpack.c.b16 %v296, %v295
    %v358 = vpack.c.b16 %v298, %v297
    %v359 = vpack.c.b16 %v300, %v299
    %v360 = vpack.c.b16 %v302, %v301
    %v361 = vpack.c.b16 %v304, %v303
    %v362 = vpack.c.b16 %v306, %v305
    %v363 = vpack.c.b16 %v308, %v307
    %v364 = vpack.c.b16 %v310, %v309
    %v365 = vpack.c.b16 %v312, %v311
    %v366 = vpack.c.b16 %v314, %v313
    %v367 = vpack.c.b16 %v316, %v315
    %v368 = vpack.c.b16 %v318, %v317
    %v369 = vpack.c.b16 %v320, %v319
    %v370 = vpack.c.b16 %v322, %v321
    %419 = vmatprep.subr.bf16.mxu0 0
    %420 = vmatpush1.bf16.msra.mxu0 %v323
    %421 = vmatprep.subr.bf16.mxu0 0
    %422 = vmatpush1.bf16.msra.mxu0 %v324
    %423 = vmatprep.subr.bf16.mxu0 0
    %424 = vmatpush1.bf16.msra.mxu0 %v325
    %425 = vmatprep.subr.bf16.mxu0 0
    %426 = vmatpush1.bf16.msra.mxu0 %v326
    %427 = vmatprep.subr.bf16.mxu0 0
    %428 = vmatpush1.bf16.msra.mxu0 %v327
    %429 = vmatprep.subr.bf16.mxu0 0
    %430 = vmatpush1.bf16.msra.mxu0 %v328
    %431 = vmatprep.subr.bf16.mxu0 0
    %432 = vmatpush1.bf16.msra.mxu0 %v329
    %433 = vmatprep.subr.bf16.mxu0 0
    %434 = vmatpush1.bf16.msra.mxu0 %v330
    %435 = vmatprep.subr.bf16.mxu0 0
    %436 = vmatpush1.bf16.msra.mxu0 %v331
    %437 = vmatprep.subr.bf16.mxu0 0
    %438 = vmatpush1.bf16.msra.mxu0 %v332
    %439 = vmatprep.subr.bf16.mxu0 0
    %440 = vmatpush1.bf16.msra.mxu0 %v333
    %441 = vmatprep.subr.bf16.mxu0 0
    %442 = vmatpush1.bf16.msra.mxu0 %v334
    %443 = vmatprep.subr.bf16.mxu0 0
    %444 = vmatpush1.bf16.msra.mxu0 %v335
    %445 = vmatprep.subr.bf16.mxu0 0
    %446 = vmatpush1.bf16.msra.mxu0 %v336
    %447 = vmatprep.subr.bf16.mxu0 0
    %448 = vmatpush1.bf16.msra.mxu0 %v337
    %449 = vmatprep.subr.bf16.mxu0 0
    %450 = vmatpush1.bf16.msra.mxu0 %v338
    %451 = vmatprep.mubr.bf16.mxu0 %v23
    %452 = vmatmul.mubr.bf16.gmra.mrb[0].mxu0 %v22
    %v453 = vpop.f32.mrb[0].mxu0
    %v454 = vadd.f32 %v129, %v453
    %v455 = vpop.f32.mrb[0].mxu0
    %v456 = vpop.f32.mrb[0].mxu0
    %v457 = vpop.f32.mrb[0].mxu0
    %458 = vdwg.mxu0
    %459 = vmatprep.subr.bf16.mxu0 0
    %460 = vmatpush1.bf16.msra.mxu0 %v339
    %461 = vmatprep.subr.bf16.mxu0 0
    %462 = vmatpush1.bf16.msra.mxu0 %v340
    %463 = vmatprep.subr.bf16.mxu0 0
    %464 = vmatpush1.bf16.msra.mxu0 %v341
    %465 = vmatprep.subr.bf16.mxu0 0
    %466 = vmatpush1.bf16.msra.mxu0 %v342
    %467 = vmatprep.subr.bf16.mxu0 0
    %468 = vmatpush1.bf16.msra.mxu0 %v343
    %469 = vmatprep.subr.bf16.mxu0 0
    %470 = vmatpush1.bf16.msra.mxu0 %v344
    %471 = vmatprep.subr.bf16.mxu0 0
    %472 = vmatpush1.bf16.msra.mxu0 %v345
    %473 = vmatprep.subr.bf16.mxu0 0
    %474 = vmatpush1.bf16.msra.mxu0 %v346
    %475 = vmatprep.subr.bf16.mxu0 0
    %476 = vmatpush1.bf16.msra.mxu0 %v347
    %477 = vmatprep.subr.bf16.mxu0 0
    %478 = vmatpush1.bf16.msra.mxu0 %v348
    %479 = vmatprep.subr.bf16.mxu0 0
    %480 = vmatpush1.bf16.msra.mxu0 %v349
    %481 = vmatprep.subr.bf16.mxu0 0
    %482 = vmatpush1.bf16.msra.mxu0 %v350
    %483 = vmatprep.subr.bf16.mxu0 0
    %484 = vmatpush1.bf16.msra.mxu0 %v351
    %485 = vmatprep.subr.bf16.mxu0 0
    %486 = vmatpush1.bf16.msra.mxu0 %v352
    %487 = vmatprep.subr.bf16.mxu0 0
    %488 = vmatpush1.bf16.msra.mxu0 %v353
    %489 = vmatprep.subr.bf16.mxu0 0
    %490 = vmatpush1.bf16.msra.mxu0 %v354
    %491 = vmatprep.mubr.bf16.mxu0 %v25
    %492 = vmatmul.mubr.bf16.gmra.mrb[0].mxu0 %v24
    %v493 = vpop.f32.mrb[0].mxu0
    %v494 = vadd.f32 %v454, %v493
    %v495 = vpop.f32.mrb[0].mxu0
    %v496 = vpop.f32.mrb[0].mxu0
    %v497 = vpop.f32.mrb[0].mxu0
    %498 = vdwg.mxu0
    %499 = vmatprep.subr.bf16.mxu0 0
    %500 = vmatpush1.bf16.msra.mxu0 %v355
    %501 = vmatprep.subr.bf16.mxu0 0
    %502 = vmatpush1.bf16.msra.mxu0 %v356
    %503 = vmatprep.subr.bf16.mxu0 0
    %504 = vmatpush1.bf16.msra.mxu0 %v357
    %505 = vmatprep.subr.bf16.mxu0 0
    %506 = vmatpush1.bf16.msra.mxu0 %v358
    %507 = vmatprep.subr.bf16.mxu0 0
    %508 = vmatpush1.bf16.msra.mxu0 %v359
    %509 = vmatprep.subr.bf16.mxu0 0
    %510 = vmatpush1.bf16.msra.mxu0 %v360
    %511 = vmatprep.subr.bf16.mxu0 0
    %512 = vmatpush1.bf16.msra.mxu0 %v361
    %513 = vmatprep.subr.bf16.mxu0 0
    %514 = vmatpush1.bf16.msra.mxu0 %v362
    %515 = vmatprep.subr.bf16.mxu0 0
    %516 = vmatpush1.bf16.msra.mxu0 %v363
    %517 = vmatprep.subr.bf16.mxu0 0
    %518 = vmatpush1.bf16.msra.mxu0 %v364
    %519 = vmatprep.subr.bf16.mxu0 0
    %520 = vmatpush1.bf16.msra.mxu0 %v365
    %521 = vmatprep.subr.bf16.mxu0 0
    %522 = vmatpush1.bf16.msra.mxu0 %v366
    %523 = vmatprep.subr.bf16.mxu0 0
    %524 = vmatpush1.bf16.msra.mxu0 %v367
    %525 = vmatprep.subr.bf16.mxu0 0
    %526 = vmatpush1.bf16.msra.mxu0 %v368
    %527 = vmatprep.subr.bf16.mxu0 0
    %528 = vmatpush1.bf16.msra.mxu0 %v369
    %529 = vmatprep.subr.bf16.mxu0 0
    %530 = vmatpush1.bf16.msra.mxu0 %v370
    %531 = vmatprep.mubr.bf16.mxu0 %v27
    %532 = vmatmul.mubr.bf16.gmra.mrb[0].mxu0 %v26
    %v533 = vpop.f32.mrb[0].mxu0
    %v534 = vadd.f32 %v494, %v533
    %v535 = vpop.f32.mrb[0].mxu0
    %v536 = vpop.f32.mrb[0].mxu0
    %v537 = vpop.f32.mrb[0].mxu0
    %538 = vdwg.mxu0
    %vm539 = vcmask 261120
    %540 = vst.msk [vmem:[#allocation2] sm:$0xff] %vm539, %v534
    // Predicated region
    $region14: #{tpu_custom_call.1} parent=1 // pred_check
      _
    $region15: #{tpu_custom_call.1} parent=1 // pred_check_branch
      %542 = sbr.rel (0) target = $region17
    $region16: #{tpu_custom_call.1} parent=1 // pred_region
      %s544 = ssub.s32 128, 128
      %545 = vsyncadd [#allocation3], %s544
      %s547 = sshll.u32 [#allocation2], 4
      %s548 = int_to_ptr.vmem [resolvable:$true] %s547
      %550 = dma.vmem_to_hbm [thread:$0]  %s548, 128, %s3, [#allocation3]
    $region17: #{tpu_custom_call.1} parent=1 // pred_fallthru
      _
    // Predicated region
    $region18: #{tpu_custom_call.1} parent=1 // pred_check
      _
    $region19: #{tpu_custom_call.1} parent=1 // pred_check_branch
      %552 = sbr.rel (0) target = $region21
    $region20: #{tpu_custom_call.1} parent=1 // pred_region
      %553 = dma.done [#allocation3], 128
    $region21: #{tpu_custom_call.1} parent=1 // pred_fallthru
      _
    %554 = vsyncpa [#allocation3], 1

</llo_original>
